<compile_context>
chip_gen: v7x
topology: tpu7x:2x2x1
jax: 0.10.0
libtpu: 0.0.40
codegen_flags: <defaults>
</compile_context>

<pallas_src>
import jax
import jax.numpy as jnp
from jax.experimental import pallas as pl
from jax.experimental.pallas import tpu as pltpu

_LANES = 128
_MAX_TILE_ROWS = 2048            # (2048, 128) f32 tile = 1 MiB per block.
_SINGLE_BLOCK_ELEMS = 32 * 1024  # <=128 KiB f32: launch-overhead regime.
_VMEM_LIMIT_BYTES = 16 * 1024 * 1024


def _round_up(v, m):
    return ((v + m - 1) // m) * m


def _fused_affine_kernel(params_ref, x_ref, o_ref):
    # params_ref (SMEM, f32[2]): [scale, bias] of the fused conv -> conv1 map.
    scale = params_ref[0]
    bias = params_ref[1]
    o_ref[...] = x_ref[...] * scale + bias


def test_model_multiple_forward(x, w0, b0, w1, b1):
    """x: (N, 1, H, W) float32. Returns (x1, x2), each (N, 1, H, W), x2 == x1."""
    N, C, H, W = x.shape
    assert C == 1, "module uses Conv2d(1, 1, 1, 1)"
    x = x.astype(jnp.float32)

    # Fold the two scalar affine maps in Python (single tiny device constant).
    scale = w0 * w1
    bias = b0 * w1 + b1
    params = jnp.asarray([scale, bias], dtype=jnp.float32)

    total = N * C * H * W

    if total <= _SINGLE_BLOCK_ELEMS:
        # Tiny input: fixed launch overhead dominates. One un-gridded
        # whole-array block, no reshape / pad / slice.
        x1 = pl.pallas_call(
            _fused_affine_kernel,
            out_shape=jax.ShapeDtypeStruct(x.shape, jnp.float32),
            in_specs=[
                pl.BlockSpec(memory_space=pltpu.SMEM),
                pl.BlockSpec(memory_space=pltpu.MemorySpace.VMEM),
            ],
            out_specs=pl.BlockSpec(memory_space=pltpu.MemorySpace.VMEM),
        )(params, x)
        return x1, x1

    # ---- Tiled, lane-dense path ----
    rows = -(-total // _LANES)                       # ceil(total / 128)
    tile_rows = min(_MAX_TILE_ROWS, _round_up(rows, 8))
    if rows >= 16:
        # v7x: keep >= 2 grid steps so the "parallel" axis feeds both TCs.
        tile_rows = min(tile_rows, _round_up(max(rows // 2, 8), 8))
    padded_rows = _round_up(rows, tile_rows)
    padded_total = padded_rows * _LANES

    needs_pad = padded_total != total
    if needs_pad:
        x2d = jnp.pad(x.reshape(total), (0, padded_total - total)).reshape(
            padded_rows, _LANES)
    else:
        # Contiguous reshape only (free); no extra HBM pass.
        x2d = x.reshape(padded_rows, _LANES)

    blk = pl.BlockSpec((tile_rows, _LANES), lambda i: (i, 0))

    y2d = pl.pallas_call(
        _fused_affine_kernel,
        out_shape=jax.ShapeDtypeStruct((padded_rows, _LANES), jnp.float32),
        grid=(padded_rows // tile_rows,),
        in_specs=[
            pl.BlockSpec(memory_space=pltpu.SMEM),   # fused [scale, bias]
            blk,                                     # x tile (auto-pipelined)
        ],
        out_specs=blk,
        compiler_params=pltpu.CompilerParams(
            dimension_semantics=("parallel",),       # shards grid over v7x TCs
            vmem_limit_bytes=_VMEM_LIMIT_BYTES,
        ),
        cost_estimate=pl.CostEstimate(
            flops=2 * padded_total,
            transcendentals=0,
            bytes_accessed=8 * padded_total,
        ),
    )(params, x2d)

    y = y2d.reshape(padded_total)
    if needs_pad:
        y = y[:total]
    x1 = y.reshape(N, C, H, W)
    # conv1 applied twice to the same input yields identical values; return the
    # same array twice instead of a second full HBM store stream.
    return x1, x1


if __name__ == "__main__":
    key = jax.random.PRNGKey(0)
    k_x, k_w, k_a, k_b = jax.random.split(key, 4)

    # Conv2d(1,1,1,1) weight/bias are scalars.
    wvals = jax.random.normal(k_w, (4,), dtype=jnp.float32)
    w0, b0, w1, b1 = (float(wvals[0]), float(wvals[1]),
                      float(wvals[2]), float(wvals[3]))

    def check(xin):
        x1, x2 = test_model_multiple_forward(xin, w0, b0, w1, b1)
        jax.block_until_ready((x1, x2))
        # Reference in plain JAX, two sequential affine ops (PyTorch order).
        y_ref = xin * w0 + b0
        x1_ref = y_ref * w1 + b1
        assert x1.shape == xin.shape and x2.shape == xin.shape
        assert jnp.allclose(x1, x1_ref, atol=1e-4, rtol=1e-5), "x1 mismatch"
        assert jnp.allclose(x2, x1_ref, atol=1e-4, rtol=1e-5), "x2 mismatch"

    # Primary small input consistent with the module: batch=2, ch=1, 16x16
    # (hits the un-gridded single-block fast path).
    check(jax.random.normal(k_x, (2, 1, 16, 16), dtype=jnp.float32))
    # Tiled path, aligned (no pad/slice), grid of 2 "parallel" steps.
    check(jax.random.normal(k_a, (2, 1, 640, 128), dtype=jnp.float32))
    # Tiled path with a ragged tail (exercises the pad/slice guard).
    check(jax.random.normal(k_b, (3, 1, 157, 129), dtype=jnp.float32))

    print("KERNEL_OK")
</pallas_src>

<mosaic_0001>
module attributes {stable_mosaic.version = 11 : i64} {
  func.func @_fused_affine_kernel(%arg0: memref<2xf32, #tpu.memory_space<smem>>, %arg1: memref<2x1x16x16xf32, #tpu.memory_space<vmem>>, %arg2: memref<2x1x16x16xf32, #tpu.memory_space<vmem>>) attributes {dimension_semantics = [], scalar_prefetch = 0 : i64, scratch_operands = 0 : i64, tpu.core_type = #tpu.core_type<tc>} {
    %c0 = arith.constant 0 : index
    %0 = memref.load %arg0[%c0] : memref<2xf32, #tpu.memory_space<smem>>
    %c1 = arith.constant 1 : index
    %1 = memref.load %arg0[%c1] : memref<2xf32, #tpu.memory_space<smem>>
    %c0_0 = arith.constant 0 : index
    %c0_1 = arith.constant 0 : index
    %c0_2 = arith.constant 0 : index
    %c0_3 = arith.constant 0 : index
    %2 = vector.load %arg1[%c0_0, %c0_1, %c0_2, %c0_3] : memref<2x1x16x16xf32, #tpu.memory_space<vmem>>, vector<2x1x16x16xf32>
    %3 = vector.broadcast %0 : f32 to vector<2x1x16x16xf32>
    %4 = arith.mulf %2, %3 : vector<2x1x16x16xf32>
    %5 = vector.broadcast %1 : f32 to vector<2x1x16x16xf32>
    %6 = arith.addf %4, %5 : vector<2x1x16x16xf32>
    %c0_4 = arith.constant 0 : index
    %c0_5 = arith.constant 0 : index
    %c0_6 = arith.constant 0 : index
    %c0_7 = arith.constant 0 : index
    %7 = vector.load %arg2[%c0_4, %c0_5, %c0_6, %c0_7] : memref<2x1x16x16xf32, #tpu.memory_space<vmem>>, vector<2x1x16x16xf32>
    tpu.vector_store %arg2[%c0_4, %c0_5, %c0_6, %c0_7], %6 {strides = array<i32>} : memref<2x1x16x16xf32, #tpu.memory_space<vmem>>, vector<2x1x16x16xf32>,
    return
  }
}

</mosaic_0001>

<llo_original>
// kernel: tpu_custom_call.1
$region0: #{tpu_custom_call.1}
  #allocation0 [shape = 'u32[]', space=smem, size = 0x4, offset = 0x4, fixed_abs, tag = 'smem constant byte address 0x4 - core index']
  #allocation1 [shape = 'u32[144,128]{1,0:T(1,128)}', space=vmem, size = 0x12000, scoped, tag = 'internal scratch']
  %s0 = inlined_call_operand.hbm [shape: f32[2], index: 0, kind: input, shape index: {}]
  %s1 = inlined_call_operand.hbm [shape: f32[2,1,16,16], index: 1, kind: input, shape index: {}]
  %s2 = inlined_call_operand.hbm [shape: f32[2,1,16,16], index: 2, kind: output, shape index: {}]
  %s3 = sld [smem:[#allocation0]]
  $region26: #{tpu_custom_call.1} parent=0
    _
  %s5 = ssub.s32 1, %s3
  %s6 = scalar_select 0, %s5, %s3
  $region1: #{tpu_custom_call.1} parent=0
    #allocation2 [shape = 'u8[512]{0}', space=smem, size = 0x200, scoped, tag = 'input window, operand 0, single buffered']
    #allocation3 [shape = 's32[1]{0}', space=sflag, size = 0x4, scoped, tag = 'scoped memory for tpu_custom_call.1']
    #allocation4 [shape = 's32[1]{0}', space=sflag, size = 0x4, scoped, tag = 'scoped memory for tpu_custom_call.1']
    #allocation5 [shape = 's32[1]{0}', space=sflag, size = 0x4, scoped, tag = 'scoped memory for tpu_custom_call.1']
    #allocation6 [shape = 'u8[16384]{0}', space=vmem, size = 0x4000, scoped, tag = 'input window, operand 1, single buffered']
    #allocation7 [shape = 'u8[16384]{0}', space=vmem, size = 0x4000, scoped, tag = 'output window, operand 0, single buffered']
    %7 = vsyncpa [#allocation5], 0
    %8 = vsyncpa [#allocation3], 0
    %9 = vsyncpa [#allocation4], 0
    // Predicated region
    $region2: #{tpu_custom_call.1} parent=1 // pred_check
      _
    $region3: #{tpu_custom_call.1} parent=1 // pred_check_branch
      %11 = sbr.rel (0) target = $region5
    $region4: #{tpu_custom_call.1} parent=1 // pred_region
      %s13 = ssub.s32 16, 16
      %14 = vsyncadd [#allocation5], %s13
      %17 = dma.hbm_to_smem %s0, 16, [#allocation2], [#allocation5]
    $region5: #{tpu_custom_call.1} parent=1 // pred_fallthru
      _
    // Predicated region
    $region6: #{tpu_custom_call.1} parent=1 // pred_check
      _
    $region7: #{tpu_custom_call.1} parent=1 // pred_check_branch
      %19 = sbr.rel (0) target = $region9
    $region8: #{tpu_custom_call.1} parent=1 // pred_region
      %s21 = ssub.s32 512, 512
      %22 = vsyncadd [#allocation3], %s21
      %s23 = sshll.u32 [#allocation6], 4
      %s24 = int_to_ptr.vmem [resolvable:$true] %s23
      %29 = dma.hbm_to_vmem [thread:$0]  %s1, 512, %s24, [#allocation3], 128, 128, 8
    $region9: #{tpu_custom_call.1} parent=1 // pred_fallthru
      _
    // Predicated region
    $region10: #{tpu_custom_call.1} parent=1 // pred_check
      _
    $region11: #{tpu_custom_call.1} parent=1 // pred_check_branch
      %31 = sbr.rel (0) target = $region13
    $region12: #{tpu_custom_call.1} parent=1 // pred_region
      %32 = dma.done [#allocation5], 16
    $region13: #{tpu_custom_call.1} parent=1 // pred_fallthru
      _
    // Predicated region
    $region14: #{tpu_custom_call.1} parent=1 // pred_check
      _
    $region15: #{tpu_custom_call.1} parent=1 // pred_check_branch
      %34 = sbr.rel (0) target = $region17
    $region16: #{tpu_custom_call.1} parent=1 // pred_region
      %35 = dma.done [#allocation3], 512
    $region17: #{tpu_custom_call.1} parent=1 // pred_fallthru
      _
    %36 = sfence
    %s37 = sld [smem:[#allocation2]]
    %s38 = sld [smem:[#allocation2 + $0x1]]
    %v39 = vld [vmem:[#allocation6] sm:$0xff]
    %v40 = vld [vmem:[#allocation6 + $0x8] sm:$0xff]
    %v41 = vld [vmem:[#allocation6 + $0x10] sm:$0xff]
    %v42 = vld [vmem:[#allocation6 + $0x18] sm:$0xff]
    %v43 = vstv %s37
    %v44 = vmul.f32 %v39, %v43
    %v45 = vmul.f32 %v40, %v43
    %v46 = vmul.f32 %v41, %v43
    %v47 = vmul.f32 %v42, %v43
    %v48 = vstv %s38
    %v49 = vadd.f32 %v44, %v48
    %v50 = vadd.f32 %v45, %v48
    %v51 = vadd.f32 %v46, %v48
    %v52 = vadd.f32 %v47, %v48
    %vm53 = vcmask 130048
    %54 = vst.msk [vmem:[#allocation7] sm:$0xff] %vm53, %v49
    %55 = vst.msk [vmem:[#allocation7 + $0x8] sm:$0xff] %vm53, %v50
    %56 = vst.msk [vmem:[#allocation7 + $0x10] sm:$0xff] %vm53, %v51
    %57 = vst.msk [vmem:[#allocation7 + $0x18] sm:$0xff] %vm53, %v52
    // Predicated region
    $region18: #{tpu_custom_call.1} parent=1 // pred_check
      _
    $region19: #{tpu_custom_call.1} parent=1 // pred_check_branch
      %59 = sbr.rel (0) target = $region21
    $region20: #{tpu_custom_call.1} parent=1 // pred_region
      %s61 = ssub.s32 512, 512
      %62 = vsyncadd [#allocation4], %s61
      %s63 = sshll.u32 [#allocation7], 4
      %s64 = int_to_ptr.vmem [resolvable:$true] %s63
      %69 = dma.vmem_to_hbm [thread:$0]  %s64, 512, %s2, [#allocation4], 128, 128, 8
    $region21: #{tpu_custom_call.1} parent=1 // pred_fallthru
      _
    // Predicated region
    $region22: #{tpu_custom_call.1} parent=1 // pred_check
      _
    $region23: #{tpu_custom_call.1} parent=1 // pred_check_branch
      %71 = sbr.rel (0) target = $region25
    $region24: #{tpu_custom_call.1} parent=1 // pred_region
      %72 = dma.done [#allocation4], 512
    $region25: #{tpu_custom_call.1} parent=1 // pred_fallthru
      _
    %73 = vsyncpa [#allocation3], 1
    %74 = vsyncpa [#allocation4], 1
    %75 = vsyncpa [#allocation5], 1

</llo_original>
